<compile_context>
chip_gen: v5e
topology: v5e:2x2
jax: 0.10.0
libtpu: 0.0.40
codegen_flags: <defaults>
</compile_context>

<pallas_src>
import functools

import jax
import jax.numpy as jnp
from jax.experimental import pallas as pl
from jax.experimental.pallas import tpu as pltpu

_EPS = 1e-5  # nn.InstanceNorm2d default eps


def _ncc_kernel(x_ref, y_ref, o_ref,
                sx_ref, sy_ref, sxx_ref, syy_ref, sxy_ref,
                *, hw, thw, need_mask):
    """Blocks: x/y (Bt, C, Thw); out (Bt, 1, 1); scratch (Bt, C, 1) f32 ×5."""
    k = pl.program_id(1)

    @pl.when(k == 0)
    def _init():
        sx_ref[...] = jnp.zeros_like(sx_ref)
        sy_ref[...] = jnp.zeros_like(sy_ref)
        sxx_ref[...] = jnp.zeros_like(sxx_ref)
        syy_ref[...] = jnp.zeros_like(syy_ref)
        sxy_ref[...] = jnp.zeros_like(sxy_ref)

    x = x_ref[...].astype(jnp.float32)
    y = y_ref[...].astype(jnp.float32)

    if need_mask:
        # Zero out padded spatial columns of the final (remainder) tile so they
        # contribute nothing to any of the sums.
        col = jax.lax.broadcasted_iota(jnp.int32, x.shape, 2) + k * thw
        valid = col < hw
        x = jnp.where(valid, x, 0.0)
        y = jnp.where(valid, y, 0.0)

    # Partial per-channel sums over the lane (spatial) axis of this tile.
    # VPU does the pairwise vreg adds; one tiny XLU cross-lane reduce per row.
    sx_ref[...] += jnp.sum(x, axis=-1, keepdims=True)
    sy_ref[...] += jnp.sum(y, axis=-1, keepdims=True)
    sxx_ref[...] += jnp.sum(x * x, axis=-1, keepdims=True)
    syy_ref[...] += jnp.sum(y * y, axis=-1, keepdims=True)
    sxy_ref[...] += jnp.sum(x * y, axis=-1, keepdims=True)

    @pl.when(k == pl.num_programs(1) - 1)
    def _finalize():
        inv_hw = jnp.float32(1.0 / hw)
        mx = sx_ref[...] * inv_hw
        my = sy_ref[...] * inv_hw
        vx = sxx_ref[...] * inv_hw - mx * mx   # biased variance (InstanceNorm2d)
        vy = syy_ref[...] * inv_hw - my * my
        # Σ_hw (x-mx)(y-my) = Σxy - HW·mx·my
        cov = sxy_ref[...] - jnp.float32(hw) * mx * my
        rx = jax.lax.rsqrt(vx + _EPS)
        ry = jax.lax.rsqrt(vy + _EPS)
        per_ch = cov * rx * ry                            # (Bt, C, 1)
        c = per_ch.shape[1]
        s = jnp.sum(per_ch, axis=1, keepdims=True) / jnp.float32(c * hw)
        o_ref[...] = (2.0 / (s + 1.0) - 1.0).astype(o_ref.dtype)


def _largest_divisor_leq(n, cap):
    cap = max(1, min(n, cap))
    for d in range(cap, 0, -1):
        if n % d == 0:
            return d
    return 1


def _choose_tiles(b, c, hw, itemsize, target_bytes=2 * 1024 * 1024):
    """Pick (Bt, Thw) so each input tile is ~2 MiB (VMEM-safe on v5e/v6e/v7x)."""
    row_bytes = c * hw * itemsize
    if row_bytes <= target_bytes:
        # Whole spatial plane fits comfortably: batch several images per step.
        bt = _largest_divisor_leq(b, max(1, target_bytes // row_bytes))
        thw = hw
    else:
        # Tile the spatial axis; one image per step.
        bt = 1
        lane_elems = max(1, target_bytes // (c * itemsize))
        thw = (lane_elems // 128) * 128
        if thw == 0 or thw >= hw or hw < 128:
            thw = hw
    return bt, thw


def ncc_score(image1, image2, if_sum=False, *, bt=None, thw=None):
    """Pallas TPU implementation of NCC_score.forward (InstanceNorm2d + NCC)."""
    b, c, h, w = image1.shape
    hw = h * w
    # Keep native dtype (e.g. bf16) — no f32 materialization in HBM.
    x = image1.reshape(b, c, hw)
    y = image2.reshape(b, c, hw)

    itemsize = jnp.dtype(x.dtype).itemsize
    auto_bt, auto_thw = _choose_tiles(b, c, hw, itemsize)
    if bt is None:
        bt = auto_bt
    if thw is None:
        thw = auto_thw
    assert b % bt == 0, (b, bt)
    assert thw == hw or thw % 128 == 0, (hw, thw)

    grid_b = b // bt
    grid_hw = pl.cdiv(hw, thw)
    need_mask = (hw % thw) != 0

    kernel = functools.partial(_ncc_kernel, hw=hw, thw=thw, need_mask=need_mask)

    out = pl.pallas_call(
        kernel,
        out_shape=jax.ShapeDtypeStruct((b, 1, 1), jnp.float32),
        grid_spec=pltpu.PrefetchScalarGridSpec(
            num_scalar_prefetch=0,
            grid=(grid_b, grid_hw),
            in_specs=[
                pl.BlockSpec((bt, c, thw), lambda i, k: (i, 0, k)),
                pl.BlockSpec((bt, c, thw), lambda i, k: (i, 0, k)),
            ],
            # Same output block across the HW (reduction) axis -> accumulator:
            # stays resident in VMEM, single writeback per batch tile.
            out_specs=pl.BlockSpec((bt, 1, 1), lambda i, k: (i, 0, 0)),
            scratch_shapes=[pltpu.VMEM((bt, c, 1), jnp.float32)
                            for _ in range(5)],
        ),
        compiler_params=pltpu.CompilerParams(
            dimension_semantics=("parallel", "arbitrary"),
            vmem_limit_bytes=32 * 1024 * 1024,
        ),
    )(x, y)

    if if_sum:
        return out.sum()
    return out


def _ncc_score_ref(image1, image2, if_sum=False):
    # Pure-JAX reference for correctness checking.
    b, c, h, w = image1.shape

    def instance_norm(a):
        m = jnp.mean(a, axis=(2, 3), keepdims=True)
        v = jnp.mean((a - m) ** 2, axis=(2, 3), keepdims=True)
        return (a - m) / jnp.sqrt(v + _EPS)

    x = instance_norm(image1).reshape(b, 1, c * h * w)
    y = instance_norm(image2).reshape(b, c * h * w, 1)
    score = jnp.matmul(x, y) / (h * w * c)
    loss = 2.0 / (score + 1.0) - 1.0
    return loss.sum() if if_sum else loss


if __name__ == "__main__":
    key = jax.random.PRNGKey(0)
    k1, k2 = jax.random.split(key)

    # Test 1: small f32 case (batch-tiled, single spatial tile).
    b, c, h, w = 2, 4, 16, 16
    image1 = jax.random.normal(k1, (b, c, h, w), dtype=jnp.float32)
    image2 = jax.random.normal(k2, (b, c, h, w), dtype=jnp.float32)
    out = jax.block_until_ready(ncc_score(image1, image2, if_sum=False))
    ref = _ncc_score_ref(image1, image2, if_sum=False)
    assert out.shape == (b, 1, 1), out.shape
    assert jnp.allclose(out, ref, atol=1e-5, rtol=1e-5), (out, ref)

    # Test 2: bf16 pass-through (no f32 pre-cast in HBM; f32 accumulation in-kernel).
    img1_bf = image1.astype(jnp.bfloat16)
    img2_bf = image2.astype(jnp.bfloat16)
    out_bf = jax.block_until_ready(ncc_score(img1_bf, img2_bf))
    ref_bf = _ncc_score_ref(img1_bf.astype(jnp.float32), img2_bf.astype(jnp.float32))
    assert jnp.allclose(out_bf, ref_bf, atol=2e-2, rtol=2e-2), (out_bf, ref_bf)

    # Test 3: spatial tiling + remainder masking + if_sum (hw=272, thw=128).
    b2, c2, h2, w2 = 2, 4, 17, 16
    k3, k4 = jax.random.split(k1)
    img3 = jax.random.normal(k3, (b2, c2, h2, w2), dtype=jnp.float32)
    img4 = jax.random.normal(k4, (b2, c2, h2, w2), dtype=jnp.float32)
    out3 = jax.block_until_ready(ncc_score(img3, img4, if_sum=True, bt=1, thw=128))
    ref3 = _ncc_score_ref(img3, img4, if_sum=True)
    assert jnp.allclose(out3, ref3, atol=1e-5, rtol=1e-5), (out3, ref3)

    print("KERNEL_OK")
</pallas_src>

<mosaic_0001>
module attributes {stable_mosaic.version = 11 : i64} {
  func.func @_ncc_kernel(%arg0: i32, %arg1: i32, %arg2: memref<2x4x256xf32, #tpu.memory_space<vmem>>, %arg3: memref<2x4x256xf32, #tpu.memory_space<vmem>>, %arg4: memref<2x1x1xf32, #tpu.memory_space<vmem>>, %arg5: memref<2x4x1xf32, #tpu.memory_space<vmem>>, %arg6: memref<2x4x1xf32, #tpu.memory_space<vmem>>, %arg7: memref<2x4x1xf32, #tpu.memory_space<vmem>>, %arg8: memref<2x4x1xf32, #tpu.memory_space<vmem>>, %arg9: memref<2x4x1xf32, #tpu.memory_space<vmem>>) attributes {dimension_semantics = [#tpu.dimension_semantics<parallel>, #tpu.dimension_semantics<arbitrary>], iteration_bounds = array<i64: 1, 1>, scalar_prefetch = 0 : i64, scratch_operands = 5 : i64, tpu.core_type = #tpu.core_type<tc>, window_params = [{transform_indices = @transform_0, window_bounds = array<i64: 2, 4, 256>}, {transform_indices = @transform_1, window_bounds = array<i64: 2, 4, 256>}, {transform_indices = @transform_2, window_bounds = array<i64: 2, 1, 1>}]} {
    %c0_i32 = arith.constant 0 : i32
    %0 = arith.cmpi eq, %arg1, %c0_i32 : i32
    %1 = arith.extui %0 : i1 to i32
    %c0_i32_0 = arith.constant 0 : i32
    %2 = arith.cmpi ne, %1, %c0_i32_0 : i32
    scf.if %2 {
      %cst_42 = arith.constant 0.000000e+00 : f32
      %36 = vector.broadcast %cst_42 : f32 to vector<2x4x1xf32>
      %c0_43 = arith.constant 0 : index
      %c0_44 = arith.constant 0 : index
      %c0_45 = arith.constant 0 : index
      %37 = vector.load %arg5[%c0_43, %c0_44, %c0_45] : memref<2x4x1xf32, #tpu.memory_space<vmem>>, vector<2x4x1xf32>
      tpu.vector_store %arg5[%c0_43, %c0_44, %c0_45], %36 {strides = array<i32>} : memref<2x4x1xf32, #tpu.memory_space<vmem>>, vector<2x4x1xf32>,
      %cst_46 = arith.constant 0.000000e+00 : f32
      %38 = vector.broadcast %cst_46 : f32 to vector<2x4x1xf32>
      %c0_47 = arith.constant 0 : index
      %c0_48 = arith.constant 0 : index
      %c0_49 = arith.constant 0 : index
      %39 = vector.load %arg6[%c0_47, %c0_48, %c0_49] : memref<2x4x1xf32, #tpu.memory_space<vmem>>, vector<2x4x1xf32>
      tpu.vector_store %arg6[%c0_47, %c0_48, %c0_49], %38 {strides = array<i32>} : memref<2x4x1xf32, #tpu.memory_space<vmem>>, vector<2x4x1xf32>,
      %cst_50 = arith.constant 0.000000e+00 : f32
      %40 = vector.broadcast %cst_50 : f32 to vector<2x4x1xf32>
      %c0_51 = arith.constant 0 : index
      %c0_52 = arith.constant 0 : index
      %c0_53 = arith.constant 0 : index
      %41 = vector.load %arg7[%c0_51, %c0_52, %c0_53] : memref<2x4x1xf32, #tpu.memory_space<vmem>>, vector<2x4x1xf32>
      tpu.vector_store %arg7[%c0_51, %c0_52, %c0_53], %40 {strides = array<i32>} : memref<2x4x1xf32, #tpu.memory_space<vmem>>, vector<2x4x1xf32>,
      %cst_54 = arith.constant 0.000000e+00 : f32
      %42 = vector.broadcast %cst_54 : f32 to vector<2x4x1xf32>
      %c0_55 = arith.constant 0 : index
      %c0_56 = arith.constant 0 : index
      %c0_57 = arith.constant 0 : index
      %43 = vector.load %arg8[%c0_55, %c0_56, %c0_57] : memref<2x4x1xf32, #tpu.memory_space<vmem>>, vector<2x4x1xf32>
      tpu.vector_store %arg8[%c0_55, %c0_56, %c0_57], %42 {strides = array<i32>} : memref<2x4x1xf32, #tpu.memory_space<vmem>>, vector<2x4x1xf32>,
      %cst_58 = arith.constant 0.000000e+00 : f32
      %44 = vector.broadcast %cst_58 : f32 to vector<2x4x1xf32>
      %c0_59 = arith.constant 0 : index
      %c0_60 = arith.constant 0 : index
      %c0_61 = arith.constant 0 : index
      %45 = vector.load %arg9[%c0_59, %c0_60, %c0_61] : memref<2x4x1xf32, #tpu.memory_space<vmem>>, vector<2x4x1xf32>
      tpu.vector_store %arg9[%c0_59, %c0_60, %c0_61], %44 {strides = array<i32>} : memref<2x4x1xf32, #tpu.memory_space<vmem>>, vector<2x4x1xf32>,
    } else {
    }
    %c0 = arith.constant 0 : index
    %c0_1 = arith.constant 0 : index
    %c0_2 = arith.constant 0 : index
    %3 = vector.load %arg2[%c0, %c0_1, %c0_2] : memref<2x4x256xf32, #tpu.memory_space<vmem>>, vector<2x4x256xf32>
    %c0_3 = arith.constant 0 : index
    %c0_4 = arith.constant 0 : index
    %c0_5 = arith.constant 0 : index
    %4 = vector.load %arg3[%c0_3, %c0_4, %c0_5] : memref<2x4x256xf32, #tpu.memory_space<vmem>>, vector<2x4x256xf32>
    %c0_6 = arith.constant 0 : index
    %c0_7 = arith.constant 0 : index
    %c0_8 = arith.constant 0 : index
    %5 = vector.load %arg5[%c0_6, %c0_7, %c0_8] : memref<2x4x1xf32, #tpu.memory_space<vmem>>, vector<2x4x1xf32>
    %cst = arith.constant dense<0.000000e+00> : vector<2x4xf32>
    %6 = vector.multi_reduction <add>, %3, %cst [2] : vector<2x4x256xf32> to vector<2x4xf32>
    %7 = vector.shape_cast %6 : vector<2x4xf32> to vector<2x4x1xf32>
    %8 = arith.addf %5, %7 : vector<2x4x1xf32>
    %c0_9 = arith.constant 0 : index
    %c0_10 = arith.constant 0 : index
    %c0_11 = arith.constant 0 : index
    %9 = vector.load %arg5[%c0_9, %c0_10, %c0_11] : memref<2x4x1xf32, #tpu.memory_space<vmem>>, vector<2x4x1xf32>
    tpu.vector_store %arg5[%c0_9, %c0_10, %c0_11], %8 {strides = array<i32>} : memref<2x4x1xf32, #tpu.memory_space<vmem>>, vector<2x4x1xf32>,
    %c0_12 = arith.constant 0 : index
    %c0_13 = arith.constant 0 : index
    %c0_14 = arith.constant 0 : index
    %10 = vector.load %arg6[%c0_12, %c0_13, %c0_14] : memref<2x4x1xf32, #tpu.memory_space<vmem>>, vector<2x4x1xf32>
    %cst_15 = arith.constant dense<0.000000e+00> : vector<2x4xf32>
    %11 = vector.multi_reduction <add>, %4, %cst_15 [2] : vector<2x4x256xf32> to vector<2x4xf32>
    %12 = vector.shape_cast %11 : vector<2x4xf32> to vector<2x4x1xf32>
    %13 = arith.addf %10, %12 : vector<2x4x1xf32>
    %c0_16 = arith.constant 0 : index
    %c0_17 = arith.constant 0 : index
    %c0_18 = arith.constant 0 : index
    %14 = vector.load %arg6[%c0_16, %c0_17, %c0_18] : memref<2x4x1xf32, #tpu.memory_space<vmem>>, vector<2x4x1xf32>
    tpu.vector_store %arg6[%c0_16, %c0_17, %c0_18], %13 {strides = array<i32>} : memref<2x4x1xf32, #tpu.memory_space<vmem>>, vector<2x4x1xf32>,
    %c0_19 = arith.constant 0 : index
    %c0_20 = arith.constant 0 : index
    %c0_21 = arith.constant 0 : index
    %15 = vector.load %arg7[%c0_19, %c0_20, %c0_21] : memref<2x4x1xf32, #tpu.memory_space<vmem>>, vector<2x4x1xf32>
    %16 = arith.mulf %3, %3 : vector<2x4x256xf32>
    %cst_22 = arith.constant dense<0.000000e+00> : vector<2x4xf32>
    %17 = vector.multi_reduction <add>, %16, %cst_22 [2] : vector<2x4x256xf32> to vector<2x4xf32>
    %18 = vector.shape_cast %17 : vector<2x4xf32> to vector<2x4x1xf32>
    %19 = arith.addf %15, %18 : vector<2x4x1xf32>
    %c0_23 = arith.constant 0 : index
    %c0_24 = arith.constant 0 : index
    %c0_25 = arith.constant 0 : index
    %20 = vector.load %arg7[%c0_23, %c0_24, %c0_25] : memref<2x4x1xf32, #tpu.memory_space<vmem>>, vector<2x4x1xf32>
    tpu.vector_store %arg7[%c0_23, %c0_24, %c0_25], %19 {strides = array<i32>} : memref<2x4x1xf32, #tpu.memory_space<vmem>>, vector<2x4x1xf32>,
    %c0_26 = arith.constant 0 : index
    %c0_27 = arith.constant 0 : index
    %c0_28 = arith.constant 0 : index
    %21 = vector.load %arg8[%c0_26, %c0_27, %c0_28] : memref<2x4x1xf32, #tpu.memory_space<vmem>>, vector<2x4x1xf32>
    %22 = arith.mulf %4, %4 : vector<2x4x256xf32>
    %cst_29 = arith.constant dense<0.000000e+00> : vector<2x4xf32>
    %23 = vector.multi_reduction <add>, %22, %cst_29 [2] : vector<2x4x256xf32> to vector<2x4xf32>
    %24 = vector.shape_cast %23 : vector<2x4xf32> to vector<2x4x1xf32>
    %25 = arith.addf %21, %24 : vector<2x4x1xf32>
    %c0_30 = arith.constant 0 : index
    %c0_31 = arith.constant 0 : index
    %c0_32 = arith.constant 0 : index
    %26 = vector.load %arg8[%c0_30, %c0_31, %c0_32] : memref<2x4x1xf32, #tpu.memory_space<vmem>>, vector<2x4x1xf32>
    tpu.vector_store %arg8[%c0_30, %c0_31, %c0_32], %25 {strides = array<i32>} : memref<2x4x1xf32, #tpu.memory_space<vmem>>, vector<2x4x1xf32>,
    %c0_33 = arith.constant 0 : index
    %c0_34 = arith.constant 0 : index
    %c0_35 = arith.constant 0 : index
    %27 = vector.load %arg9[%c0_33, %c0_34, %c0_35] : memref<2x4x1xf32, #tpu.memory_space<vmem>>, vector<2x4x1xf32>
    %28 = arith.mulf %3, %4 : vector<2x4x256xf32>
    %cst_36 = arith.constant dense<0.000000e+00> : vector<2x4xf32>
    %29 = vector.multi_reduction <add>, %28, %cst_36 [2] : vector<2x4x256xf32> to vector<2x4xf32>
    %30 = vector.shape_cast %29 : vector<2x4xf32> to vector<2x4x1xf32>
    %31 = arith.addf %27, %30 : vector<2x4x1xf32>
    %c0_37 = arith.constant 0 : index
    %c0_38 = arith.constant 0 : index
    %c0_39 = arith.constant 0 : index
    %32 = vector.load %arg9[%c0_37, %c0_38, %c0_39] : memref<2x4x1xf32, #tpu.memory_space<vmem>>, vector<2x4x1xf32>
    tpu.vector_store %arg9[%c0_37, %c0_38, %c0_39], %31 {strides = array<i32>} : memref<2x4x1xf32, #tpu.memory_space<vmem>>, vector<2x4x1xf32>,
    %c0_i32_40 = arith.constant 0 : i32
    %33 = arith.cmpi eq, %arg1, %c0_i32_40 : i32
    %34 = arith.extui %33 : i1 to i32
    %c0_i32_41 = arith.constant 0 : i32
    %35 = arith.cmpi ne, %34, %c0_i32_41 : i32
    scf.if %35 {
      %c0_42 = arith.constant 0 : index
      %c0_43 = arith.constant 0 : index
      %c0_44 = arith.constant 0 : index
      %36 = vector.load %arg5[%c0_42, %c0_43, %c0_44] : memref<2x4x1xf32, #tpu.memory_space<vmem>>, vector<2x4x1xf32>
      %cst_45 = arith.constant 3.906250e-03 : f32
      %37 = vector.broadcast %cst_45 : f32 to vector<2x4x1xf32>
      %38 = arith.mulf %36, %37 : vector<2x4x1xf32>
      %c0_46 = arith.constant 0 : index
      %c0_47 = arith.constant 0 : index
      %c0_48 = arith.constant 0 : index
      %39 = vector.load %arg6[%c0_46, %c0_47, %c0_48] : memref<2x4x1xf32, #tpu.memory_space<vmem>>, vector<2x4x1xf32>
      %cst_49 = arith.constant 3.906250e-03 : f32
      %40 = vector.broadcast %cst_49 : f32 to vector<2x4x1xf32>
      %41 = arith.mulf %39, %40 : vector<2x4x1xf32>
      %c0_50 = arith.constant 0 : index
      %c0_51 = arith.constant 0 : index
      %c0_52 = arith.constant 0 : index
      %42 = vector.load %arg7[%c0_50, %c0_51, %c0_52] : memref<2x4x1xf32, #tpu.memory_space<vmem>>, vector<2x4x1xf32>
      %cst_53 = arith.constant 3.906250e-03 : f32
      %43 = vector.broadcast %cst_53 : f32 to vector<2x4x1xf32>
      %44 = arith.mulf %42, %43 : vector<2x4x1xf32>
      %45 = arith.mulf %38, %38 : vector<2x4x1xf32>
      %46 = arith.subf %44, %45 : vector<2x4x1xf32>
      %c0_54 = arith.constant 0 : index
      %c0_55 = arith.constant 0 : index
      %c0_56 = arith.constant 0 : index
      %47 = vector.load %arg8[%c0_54, %c0_55, %c0_56] : memref<2x4x1xf32, #tpu.memory_space<vmem>>, vector<2x4x1xf32>
      %cst_57 = arith.constant 3.906250e-03 : f32
      %48 = vector.broadcast %cst_57 : f32 to vector<2x4x1xf32>
      %49 = arith.mulf %47, %48 : vector<2x4x1xf32>
      %50 = arith.mulf %41, %41 : vector<2x4x1xf32>
      %51 = arith.subf %49, %50 : vector<2x4x1xf32>
      %c0_58 = arith.constant 0 : index
      %c0_59 = arith.constant 0 : index
      %c0_60 = arith.constant 0 : index
      %52 = vector.load %arg9[%c0_58, %c0_59, %c0_60] : memref<2x4x1xf32, #tpu.memory_space<vmem>>, vector<2x4x1xf32>
      %cst_61 = arith.constant 2.560000e+02 : f32
      %53 = vector.broadcast %cst_61 : f32 to vector<2x4x1xf32>
      %54 = arith.mulf %53, %38 : vector<2x4x1xf32>
      %55 = arith.mulf %54, %41 : vector<2x4x1xf32>
      %56 = arith.subf %52, %55 : vector<2x4x1xf32>
      %cst_62 = arith.constant 9.99999974E-6 : f32
      %57 = vector.broadcast %cst_62 : f32 to vector<2x4x1xf32>
      %58 = arith.addf %46, %57 : vector<2x4x1xf32>
      %59 = math.rsqrt %58 : vector<2x4x1xf32>
      %cst_63 = arith.constant 9.99999974E-6 : f32
      %60 = vector.broadcast %cst_63 : f32 to vector<2x4x1xf32>
      %61 = arith.addf %51, %60 : vector<2x4x1xf32>
      %62 = math.rsqrt %61 : vector<2x4x1xf32>
      %63 = arith.mulf %56, %59 : vector<2x4x1xf32>
      %64 = arith.mulf %63, %62 : vector<2x4x1xf32>
      %cst_64 = arith.constant dense<0.000000e+00> : vector<2x1xf32>
      %65 = vector.multi_reduction <add>, %64, %cst_64 [1] : vector<2x4x1xf32> to vector<2x1xf32>
      %66 = vector.shape_cast %65 : vector<2x1xf32> to vector<2x1x1xf32>
      %cst_65 = arith.constant 1.024000e+03 : f32
      %67 = vector.broadcast %cst_65 : f32 to vector<2x1x1xf32>
      %68 = arith.divf %66, %67 : vector<2x1x1xf32>
      %cst_66 = arith.constant 1.000000e+00 : f32
      %69 = vector.broadcast %cst_66 : f32 to vector<2x1x1xf32>
      %70 = arith.addf %68, %69 : vector<2x1x1xf32>
      %cst_67 = arith.constant 2.000000e+00 : f32
      %71 = vector.broadcast %cst_67 : f32 to vector<2x1x1xf32>
      %72 = arith.divf %71, %70 : vector<2x1x1xf32>
      %cst_68 = arith.constant 1.000000e+00 : f32
      %73 = vector.broadcast %cst_68 : f32 to vector<2x1x1xf32>
      %74 = arith.subf %72, %73 : vector<2x1x1xf32>
      %c0_69 = arith.constant 0 : index
      %c0_70 = arith.constant 0 : index
      %c0_71 = arith.constant 0 : index
      %75 = vector.load %arg4[%c0_69, %c0_70, %c0_71] : memref<2x1x1xf32, #tpu.memory_space<vmem>>, vector<2x1x1xf32>
      tpu.vector_store %arg4[%c0_69, %c0_70, %c0_71], %74 {strides = array<i32>} : memref<2x1x1xf32, #tpu.memory_space<vmem>>, vector<2x1x1xf32>,
    } else {
    }
    return
  }
  func.func @transform_0(%arg0: i32, %arg1: i32) -> (i32, i32, i32) {
    %c0_i32 = arith.constant 0 : i32
    %c0_i32_0 = arith.constant 0 : i32
    return %arg0, %c0_i32, %arg1 : i32, i32, i32
  }
  func.func @transform_1(%arg0: i32, %arg1: i32) -> (i32, i32, i32) {
    %c0_i32 = arith.constant 0 : i32
    %c0_i32_0 = arith.constant 0 : i32
    return %arg0, %c0_i32, %arg1 : i32, i32, i32
  }
  func.func @transform_2(%arg0: i32, %arg1: i32) -> (i32, i32, i32) {
    %c0_i32 = arith.constant 0 : i32
    %c0_i32_0 = arith.constant 0 : i32
    %c0_i32_1 = arith.constant 0 : i32
    return %arg0, %c0_i32, %c0_i32_0 : i32, i32, i32
  }
}

</mosaic_0001>

<llo_original>
// kernel: tpu_custom_call.1
$region0: #{tpu_custom_call.1}
  #allocation0 [shape = 'u32[]', space=smem, size = 0x4, offset = 0x4, fixed_abs, tag = 'smem constant byte address 0x4 - core index']
  #allocation1 [shape = 'u32[72,128]{1,0:T(1,128)}', space=vmem, size = 0x9000, scoped, tag = 'internal scratch']
  #allocation2 [shape = 'f32[2,4,1]{2,1,0:T(4,128)}', space=vmem, size = 0x1000, scoped, tag = 'scratch operand']
  #allocation3 [shape = 'f32[2,4,1]{2,1,0:T(4,128)}', space=vmem, size = 0x1000, scoped, tag = 'scratch operand']
  #allocation4 [shape = 'f32[2,4,1]{2,1,0:T(4,128)}', space=vmem, size = 0x1000, scoped, tag = 'scratch operand']
  #allocation5 [shape = 'f32[2,4,1]{2,1,0:T(4,128)}', space=vmem, size = 0x1000, scoped, tag = 'scratch operand']
  #allocation6 [shape = 'f32[2,4,1]{2,1,0:T(4,128)}', space=vmem, size = 0x1000, scoped, tag = 'scratch operand']
  %s0 = inlined_call_operand.hbm [shape: f32[2,4,256], index: 0, kind: input, shape index: {}]
  %s1 = inlined_call_operand.hbm [shape: f32[2,4,256], index: 1, kind: input, shape index: {}]
  %s2 = inlined_call_operand.vmem [shape: f32[2,1,1], index: 2, kind: output, shape index: {}]
  %s3 = sld [smem:[#allocation0]]
  $region34: #{tpu_custom_call.1} parent=0
    _
  %s5 = ssub.s32 1, %s3
  %s6 = scalar_select 0, %s5, %s3
  $region1: #{tpu_custom_call.1} parent=0
    #allocation7 [shape = 'u8[8192]{0}', space=vmem, size = 0x2000, scoped, tag = 'input window, operand 0, single buffered']
    #allocation8 [shape = 's32[1]{0}', space=sflag, size = 0x4, scoped, tag = 'scoped memory for tpu_custom_call.1']
    #allocation9 [shape = 'u8[8192]{0}', space=vmem, size = 0x2000, scoped, tag = 'input window, operand 1, single buffered']
    #allocation10 [shape = 's32[1]{0}', space=sflag, size = 0x4, scoped, tag = 'scoped memory for tpu_custom_call.1']
    %7 = vsyncpa [#allocation8], 0
    %8 = vsyncpa [#allocation10], 0
    // Predicated region
    $region2: #{tpu_custom_call.1} parent=1 // pred_check
      _
    $region3: #{tpu_custom_call.1} parent=1 // pred_check_branch
      %10 = sbr.rel (0) target = $region5
    $region4: #{tpu_custom_call.1} parent=1 // pred_region
      %12 = vsyncadd [#allocation8], 0
      %s13 = sshll.u32 %s0, 4
      %s14 = int_to_ptr.hbm [resolvable:$true] %s13
      %s15 = sshll.u32 [#allocation7], 4
      %s16 = int_to_ptr.vmem [resolvable:$true] %s15
      %21 = dma.hbm_to_vmem [thread:$0]  %s14, 256, %s16, [#allocation8], 128, 128, 8
    $region5: #{tpu_custom_call.1} parent=1 // pred_fallthru
      _
    // Predicated region
    $region6: #{tpu_custom_call.1} parent=1 // pred_check
      _
    $region7: #{tpu_custom_call.1} parent=1 // pred_check_branch
      %23 = sbr.rel (0) target = $region9
    $region8: #{tpu_custom_call.1} parent=1 // pred_region
      %25 = vsyncadd [#allocation10], 0
      %s26 = sshll.u32 %s1, 4
      %s27 = int_to_ptr.hbm [resolvable:$true] %s26
      %s28 = sshll.u32 [#allocation9], 4
      %s29 = int_to_ptr.vmem [resolvable:$true] %s28
      %34 = dma.hbm_to_vmem [thread:$0]  %s27, 256, %s29, [#allocation10], 128, 128, 8
    $region9: #{tpu_custom_call.1} parent=1 // pred_fallthru
      _
    // Predicated region
    $region10: #{tpu_custom_call.1} parent=1 // pred_check
      _
    $region11: #{tpu_custom_call.1} parent=1 // pred_check_branch
      %36 = sbr.rel (0) target = $region13
    $region12: #{tpu_custom_call.1} parent=1 // pred_region
      %38 = dma.done [#allocation8], 256
    $region13: #{tpu_custom_call.1} parent=1 // pred_fallthru
      _
    // Predicated region
    $region14: #{tpu_custom_call.1} parent=1 // pred_check
      _
    $region15: #{tpu_custom_call.1} parent=1 // pred_check_branch
      %40 = sbr.rel (0) target = $region17
    $region16: #{tpu_custom_call.1} parent=1 // pred_region
      %42 = dma.done [#allocation10], 256
    $region17: #{tpu_custom_call.1} parent=1 // pred_fallthru
      _
    %p43 = scmp.eq.s32.totalorder 0, 0
    // Predicated region
    $region18: #{tpu_custom_call.1} parent=1 // pred_check
      %p44 = pneg %p43
    $region19: #{tpu_custom_call.1} parent=1 // pred_check_branch
      %46 = sbr.rel (%p44) target = $region21
    $region20: #{tpu_custom_call.1} parent=1 // pred_region
      %vm47 = vcmask 3072
      %48 = vst.msk [vmem:[#allocation2] sm:$0xf] %vm47, 0.0
      %49 = vst.msk [vmem:[#allocation2 + $0x4] sm:$0xf] %vm47, 0.0
      %50 = vst.msk [vmem:[#allocation3] sm:$0xf] %vm47, 0.0
      %51 = vst.msk [vmem:[#allocation3 + $0x4] sm:$0xf] %vm47, 0.0
      %52 = vst.msk [vmem:[#allocation4] sm:$0xf] %vm47, 0.0
      %53 = vst.msk [vmem:[#allocation4 + $0x4] sm:$0xf] %vm47, 0.0
      %54 = vst.msk [vmem:[#allocation5] sm:$0xf] %vm47, 0.0
      %55 = vst.msk [vmem:[#allocation5 + $0x4] sm:$0xf] %vm47, 0.0
      %56 = vst.msk [vmem:[#allocation6] sm:$0xf] %vm47, 0.0
      %57 = vst.msk [vmem:[#allocation6 + $0x4] sm:$0xf] %vm47, 0.0
    $region21: #{tpu_custom_call.1} parent=1 // pred_fallthru
      _
    %v58 = vld [vmem:[#allocation7] sm:$0xff]
    %v59 = vld [vmem:[#allocation7 + $0x8] sm:$0xff]
    %v60 = vld [vmem:[#allocation9] sm:$0xff]
    %v61 = vld [vmem:[#allocation9 + $0x8] sm:$0xff]
    %v62 = vld [vmem:[#allocation2] sm:$0xf]
    %v63 = vld [vmem:[#allocation2 + $0x4] sm:$0xf]
    %66 = vst [vmem:[#allocation1] ss:$2 sm:$0xff] %v58
    %v67 = vld.sshfl [vmem:[#allocation1] sm:$0xff pattern:$0x75316420]
    %v68 = vld.sshfl [vmem:[#allocation1 + $0x8] sm:$0xff pattern:$0x75316420]
    %s69 = scalar_lea.vmem [#allocation1], 16
    %70 = vst [vmem:[%s69] ss:$2 sm:$0xff] %v59
    %v71 = vld.sshfl [vmem:[#allocation1 + $0x10] sm:$0xff pattern:$0x75316420]
    %v72 = vld.sshfl [vmem:[#allocation1 + $0x18] sm:$0xff pattern:$0x75316420]
    %vm77 = vcmask 1043456
    %v78 = vsel %vm77, %v67, 0.0
    %v79 = vsel %vm77, %v68, 0.0
    %v80 = vadd.f32 %v78, %v79
    %81 = vadd.xlane.f32.xlu0 %v80
    %v82 = vpop.xlane.xlu0 %81
    %v83 = vsel %vm77, %v71, 0.0
    %v84 = vsel %vm77, %v72, 0.0
    %v85 = vadd.f32 %v83, %v84
    %86 = vadd.xlane.f32.xlu0 %v85
    %v87 = vpop.xlane.xlu0 %86
    %v88 = vadd.f32 %v62, %v82
    %v89 = vadd.f32 %v63, %v87
    %vm90 = vcmask 3072
    %91 = vst.msk [vmem:[#allocation2] sm:$0xf] %vm90, %v88
    %92 = vst.msk [vmem:[#allocation2 + $0x4] sm:$0xf] %vm90, %v89
    %v93 = vld [vmem:[#allocation3] sm:$0xf]
    %v94 = vld [vmem:[#allocation3 + $0x4] sm:$0xf]
    %97 = vst [vmem:[#allocation1] ss:$2 sm:$0xff] %v60
    %v98 = vld.sshfl [vmem:[#allocation1] sm:$0xff pattern:$0x75316420]
    %v99 = vld.sshfl [vmem:[#allocation1 + $0x8] sm:$0xff pattern:$0x75316420]
    %s100 = scalar_lea.vmem [#allocation1], 16
    %101 = vst [vmem:[%s100] ss:$2 sm:$0xff] %v61
    %v102 = vld.sshfl [vmem:[#allocation1 + $0x10] sm:$0xff pattern:$0x75316420]
    %v103 = vld.sshfl [vmem:[#allocation1 + $0x18] sm:$0xff pattern:$0x75316420]
    %v108 = vsel %vm77, %v98, 0.0
    %v109 = vsel %vm77, %v99, 0.0
    %v110 = vadd.f32 %v108, %v109
    %111 = vadd.xlane.f32.xlu0 %v110
    %v112 = vpop.xlane.xlu0 %111
    %v113 = vsel %vm77, %v102, 0.0
    %v114 = vsel %vm77, %v103, 0.0
    %v115 = vadd.f32 %v113, %v114
    %116 = vadd.xlane.f32.xlu0 %v115
    %v117 = vpop.xlane.xlu0 %116
    %v118 = vadd.f32 %v93, %v112
    %v119 = vadd.f32 %v94, %v117
    %120 = vst.msk [vmem:[#allocation3] sm:$0xf] %vm90, %v118
    %121 = vst.msk [vmem:[#allocation3 + $0x4] sm:$0xf] %vm90, %v119
    %v122 = vld [vmem:[#allocation4] sm:$0xf]
    %v123 = vld [vmem:[#allocation4 + $0x4] sm:$0xf]
    %v124 = vmul.f32 %v58, %v58
    %v125 = vmul.f32 %v59, %v59
    %128 = vst [vmem:[#allocation1] ss:$2 sm:$0xff] %v124
    %v129 = vld.sshfl [vmem:[#allocation1] sm:$0xff pattern:$0x75316420]
    %v130 = vld.sshfl [vmem:[#allocation1 + $0x8] sm:$0xff pattern:$0x75316420]
    %s131 = scalar_lea.vmem [#allocation1], 16
    %132 = vst [vmem:[%s131] ss:$2 sm:$0xff] %v125
    %v133 = vld.sshfl [vmem:[#allocation1 + $0x10] sm:$0xff pattern:$0x75316420]
    %v134 = vld.sshfl [vmem:[#allocation1 + $0x18] sm:$0xff pattern:$0x75316420]
    %v139 = vsel %vm77, %v129, 0.0
    %v140 = vsel %vm77, %v130, 0.0
    %v141 = vadd.f32 %v139, %v140
    %142 = vadd.xlane.f32.xlu0 %v141
    %v143 = vpop.xlane.xlu0 %142
    %v144 = vsel %vm77, %v133, 0.0
    %v145 = vsel %vm77, %v134, 0.0
    %v146 = vadd.f32 %v144, %v145
    %147 = vadd.xlane.f32.xlu0 %v146
    %v148 = vpop.xlane.xlu0 %147
    %v149 = vadd.f32 %v122, %v143
    %v150 = vadd.f32 %v123, %v148
    %151 = vst.msk [vmem:[#allocation4] sm:$0xf] %vm90, %v149
    %152 = vst.msk [vmem:[#allocation4 + $0x4] sm:$0xf] %vm90, %v150
    %v153 = vld [vmem:[#allocation5] sm:$0xf]
    %v154 = vld [vmem:[#allocation5 + $0x4] sm:$0xf]
    %v155 = vmul.f32 %v60, %v60
    %v156 = vmul.f32 %v61, %v61
    %159 = vst [vmem:[#allocation1] ss:$2 sm:$0xff] %v155
    %v160 = vld.sshfl [vmem:[#allocation1] sm:$0xff pattern:$0x75316420]
    %v161 = vld.sshfl [vmem:[#allocation1 + $0x8] sm:$0xff pattern:$0x75316420]
    %s162 = scalar_lea.vmem [#allocation1], 16
    %163 = vst [vmem:[%s162] ss:$2 sm:$0xff] %v156
    %v164 = vld.sshfl [vmem:[#allocation1 + $0x10] sm:$0xff pattern:$0x75316420]
    %v165 = vld.sshfl [vmem:[#allocation1 + $0x18] sm:$0xff pattern:$0x75316420]
    %v170 = vsel %vm77, %v160, 0.0
    %v171 = vsel %vm77, %v161, 0.0
    %v172 = vadd.f32 %v170, %v171
    %173 = vadd.xlane.f32.xlu0 %v172
    %v174 = vpop.xlane.xlu0 %173
    %v175 = vsel %vm77, %v164, 0.0
    %v176 = vsel %vm77, %v165, 0.0
    %v177 = vadd.f32 %v175, %v176
    %178 = vadd.xlane.f32.xlu0 %v177
    %v179 = vpop.xlane.xlu0 %178
    %v180 = vadd.f32 %v153, %v174
    %v181 = vadd.f32 %v154, %v179
    %182 = vst.msk [vmem:[#allocation5] sm:$0xf] %vm90, %v180
    %183 = vst.msk [vmem:[#allocation5 + $0x4] sm:$0xf] %vm90, %v181
    %v184 = vld [vmem:[#allocation6] sm:$0xf]
    %v185 = vld [vmem:[#allocation6 + $0x4] sm:$0xf]
    %v186 = vmul.f32 %v58, %v60
    %v187 = vmul.f32 %v59, %v61
    %190 = vst [vmem:[#allocation1] ss:$2 sm:$0xff] %v186
    %v191 = vld.sshfl [vmem:[#allocation1] sm:$0xff pattern:$0x75316420]
    %v192 = vld.sshfl [vmem:[#allocation1 + $0x8] sm:$0xff pattern:$0x75316420]
    %s193 = scalar_lea.vmem [#allocation1], 16
    %194 = vst [vmem:[%s193] ss:$2 sm:$0xff] %v187
    %v195 = vld.sshfl [vmem:[#allocation1 + $0x10] sm:$0xff pattern:$0x75316420]
    %v196 = vld.sshfl [vmem:[#allocation1 + $0x18] sm:$0xff pattern:$0x75316420]
    %v201 = vsel %vm77, %v191, 0.0
    %v202 = vsel %vm77, %v192, 0.0
    %v203 = vadd.f32 %v201, %v202
    %204 = vadd.xlane.f32.xlu0 %v203
    %v205 = vpop.xlane.xlu0 %204
    %v206 = vsel %vm77, %v195, 0.0
    %v207 = vsel %vm77, %v196, 0.0
    %v208 = vadd.f32 %v206, %v207
    %209 = vadd.xlane.f32.xlu0 %v208
    %v210 = vpop.xlane.xlu0 %209
    %v211 = vadd.f32 %v184, %v205
    %v212 = vadd.f32 %v185, %v210
    %213 = vst.msk [vmem:[#allocation6] sm:$0xf] %vm90, %v211
    %214 = vst.msk [vmem:[#allocation6 + $0x4] sm:$0xf] %vm90, %v212
    // Predicated region
    $region22: #{tpu_custom_call.1} parent=1 // pred_check
      %p215 = pneg %p43
    $region23: #{tpu_custom_call.1} parent=1 // pred_check_branch
      %217 = sbr.rel (%p215) target = $region25
    $region24: #{tpu_custom_call.1} parent=1 // pred_region
      %v218 = vld [vmem:[#allocation2] sm:$0xf]
      %v219 = vld [vmem:[#allocation2 + $0x4] sm:$0xf]
      %v220 = vmul.f32 %v218, 0.00390625
      %v221 = vmul.f32 %v219, 0.00390625
      %v222 = vld [vmem:[#allocation3] sm:$0xf]
      %v223 = vld [vmem:[#allocation3 + $0x4] sm:$0xf]
      %v224 = vmul.f32 %v222, 0.00390625
      %v225 = vmul.f32 %v223, 0.00390625
      %v226 = vld [vmem:[#allocation4] sm:$0xf]
      %v227 = vld [vmem:[#allocation4 + $0x4] sm:$0xf]
      %v228 = vmul.f32 %v226, 0.00390625
      %v229 = vmul.f32 %v227, 0.00390625
      %v230 = vmul.f32 %v220, %v220
      %v231 = vmul.f32 %v221, %v221
      %v232 = vsub.f32 %v228, %v230
      %v233 = vsub.f32 %v229, %v231
      %v234 = vld [vmem:[#allocation5] sm:$0xf]
      %v235 = vld [vmem:[#allocation5 + $0x4] sm:$0xf]
      %v236 = vmul.f32 %v234, 0.00390625
      %v237 = vmul.f32 %v235, 0.00390625
      %v238 = vmul.f32 %v224, %v224
      %v239 = vmul.f32 %v225, %v225
      %v240 = vsub.f32 %v236, %v238
      %v241 = vsub.f32 %v237, %v239
      %v242 = vld [vmem:[#allocation6] sm:$0xf]
      %v243 = vld [vmem:[#allocation6 + $0x4] sm:$0xf]
      %v244 = vmul.f32 %v220, 256.0
      %v245 = vmul.f32 %v221, 256.0
      %v246 = vmul.f32 %v244, %v224
      %v247 = vmul.f32 %v245, %v225
      %v248 = vsub.f32 %v242, %v246
      %v249 = vsub.f32 %v243, %v247
      %v250 = vadd.f32 %v232, 1e-05
      %v251 = vadd.f32 %v233, 1e-05
      %v252 = vrsqrt.pop %v250
      %v253 = vmul.f32 %v252, %v250
      %v254 = vmul.f32 %v253, %v252
      %v255 = vmul.f32 0.5, %v254
      %v256 = vsub.f32 1.5, %v255
      %v257 = vmul.f32 %v252, %v256
      %vm258 = vweird.f32 %v250
      %vm259 = vweird.f32 %v252
      %vm260 = vmor %vm258, %vm259
      %v261 = vsel %vm260, %v252, %v257
      %v262 = vrsqrt.pop %v251
      %v263 = vmul.f32 %v262, %v251
      %v264 = vmul.f32 %v263, %v262
      %v265 = vmul.f32 0.5, %v264
      %v266 = vsub.f32 1.5, %v265
      %v267 = vmul.f32 %v262, %v266
      %vm268 = vweird.f32 %v251
      %vm269 = vweird.f32 %v262
      %vm270 = vmor %vm268, %vm269
      %v271 = vsel %vm270, %v262, %v267
      %v272 = vadd.f32 %v240, 1e-05
      %v273 = vadd.f32 %v241, 1e-05
      %v274 = vrsqrt.pop %v272
      %v275 = vmul.f32 %v274, %v272
      %v276 = vmul.f32 %v275, %v274
      %v277 = vmul.f32 0.5, %v276
      %v278 = vsub.f32 1.5, %v277
      %v279 = vmul.f32 %v274, %v278
      %vm280 = vweird.f32 %v272
      %vm281 = vweird.f32 %v274
      %vm282 = vmor %vm280, %vm281
      %v283 = vsel %vm282, %v274, %v279
      %v284 = vrsqrt.pop %v273
      %v285 = vmul.f32 %v284, %v273
      %v286 = vmul.f32 %v285, %v284
      %v287 = vmul.f32 0.5, %v286
      %v288 = vsub.f32 1.5, %v287
      %v289 = vmul.f32 %v284, %v288
      %vm290 = vweird.f32 %v273
      %vm291 = vweird.f32 %v284
      %vm292 = vmor %vm290, %vm291
      %v293 = vsel %vm292, %v284, %v289
      %v294 = vmul.f32 %v248, %v261
      %v295 = vmul.f32 %v249, %v271
      %v296 = vmul.f32 %v294, %v283
      %v297 = vmul.f32 %v295, %v293
      %v298 = vsel %vm90, %v296, 0.0
      %v299 = vrot.slane %v298, 4
      %v300 = vadd.f32 %v298, %v299
      %v301 = vrot.slane %v300, 2
      %v302 = vadd.f32 %v300, %v301
      %v303 = vrot.slane %v302, 1
      %v304 = vadd.f32 %v302, %v303
      %v305 = vsel %vm90, %v297, 0.0
      %v306 = vrot.slane %v305, 4
      %v307 = vadd.f32 %v305, %v306
      %v308 = vrot.slane %v307, 2
      %v309 = vadd.f32 %v307, %v308
      %v310 = vrot.slane %v309, 1
      %v311 = vadd.f32 %v309, %v310
      %v312 = vrcp.pop 1024.0
      %v313 = vmul.f32 1024.0, %v312
      %v314 = vsub.f32 1.0, %v313
      %v315 = vmul.f32 %v312, %v314
      %v316 = vadd.f32 %v312, %v315
      %vm317 = vweird.f32 %v312
      %v318 = vsel %vm317, %v312, %v316
      %v319 = vmul.f32 %v304, %v318
      %v320 = vmul.f32 %v311, %v318
      %v321 = vadd.f32 %v319, 1.0
      %v322 = vadd.f32 %v320, 1.0
      %v323 = vrcp.pop %v321
      %v324 = vmul.f32 %v321, %v323
      %v325 = vsub.f32 1.0, %v324
      %v326 = vmul.f32 %v323, %v325
      %v327 = vadd.f32 %v323, %v326
      %vm328 = vweird.f32 %v321
      %vm329 = vweird.f32 %v323
      %vm330 = vmor %vm328, %vm329
      %v331 = vsel %vm330, %v323, %v327
      %v332 = vand.u32 2147483647, %v321
      %vm333 = vcmp.eq.f32.partialorder %v332, 8.507059e+37
      %v334 = vand.u32 %v321, 2147483648
      %v335 = vor.u32 1.1754944e-38, %v334
      %v336 = vsel %vm333, %v335, %v331
      %v337 = vmul.f32 2.0, %v336
      %v338 = vrcp.pop %v322
      %v339 = vmul.f32 %v322, %v338
      %v340 = vsub.f32 1.0, %v339
      %v341 = vmul.f32 %v338, %v340
      %v342 = vadd.f32 %v338, %v341
      %vm343 = vweird.f32 %v322
      %vm344 = vweird.f32 %v338
      %vm345 = vmor %vm343, %vm344
      %v346 = vsel %vm345, %v338, %v342
      %v347 = vand.u32 2147483647, %v322
      %vm348 = vcmp.eq.f32.partialorder %v347, 8.507059e+37
      %v349 = vand.u32 %v322, 2147483648
      %v350 = vor.u32 1.1754944e-38, %v349
      %v351 = vsel %vm348, %v350, %v346
      %v352 = vmul.f32 2.0, %v351
      %v353 = vsub.f32 %v337, 1.0
      %v354 = vsub.f32 %v352, 1.0
      %vm355 = vcmask 0
      %356 = vst.msk [vmem:[%s2] sm:$0x1] %vm355, %v353
      %357 = vst.msk [vmem:[%s2 + $0x1] sm:$0x1] %vm355, %v354
    $region25: #{tpu_custom_call.1} parent=1 // pred_fallthru
      _
    // Predicated region
    $region26: #{tpu_custom_call.1} parent=1 // pred_check
      _
    $region27: #{tpu_custom_call.1} parent=1 // pred_check_branch
      %359 = sbr.rel (0) target = $region29
    $region28: #{tpu_custom_call.1} parent=1 // pred_region
      _
    $region29: #{tpu_custom_call.1} parent=1 // pred_fallthru
      _
    // Predicated region
    $region30: #{tpu_custom_call.1} parent=1 // pred_check
      _
    $region31: #{tpu_custom_call.1} parent=1 // pred_check_branch
      %361 = sbr.rel (0) target = $region33
    $region32: #{tpu_custom_call.1} parent=1 // pred_region
      _
    $region33: #{tpu_custom_call.1} parent=1 // pred_fallthru
      _
    %362 = vsyncpa [#allocation8], 1
    %363 = vsyncpa [#allocation10], 1

</llo_original>
